<compile_context>
chip_gen: v6e
topology: v6e:2x2x1
jax: 0.10.0
libtpu: 0.0.40
codegen_flags: <defaults>
</compile_context>

<pallas_src>
import functools

import jax
import jax.numpy as jnp
from jax.experimental import pallas as pl
from jax.experimental.pallas import tpu as pltpu


# --------------------------------------------------------------------------
# Generation-aware VMEM limit
# --------------------------------------------------------------------------
@functools.lru_cache(maxsize=None)
def _vmem_limit():
    cap = 128 * 1024 * 1024
    try:
        cap = int(pltpu.get_tpu_info().vmem_capacity_bytes)
    except Exception:
        pass
    # ~96 MiB on 128-MiB parts (v5e/v6e), ~48 MiB on 64-MiB parts (v7x)
    return min((cap * 3) // 4, 100 * 1024 * 1024)


# --------------------------------------------------------------------------
# Tile selection: aligned divisor <= pref, else zero-pad to a multiple of pref
# --------------------------------------------------------------------------
def _tile(dim, pref, align):
    """Return (tile, padded_dim)."""
    if dim <= pref:
        return dim, dim                      # full-extent block (always legal)
    t = (pref // align) * align
    floor = max(align, pref // 4)
    while t >= floor:
        if dim % t == 0:
            return t, dim
        t -= align
    padded = -(-dim // pref) * pref          # ceil to multiple of pref
    return pref, padded


# --------------------------------------------------------------------------
# Tiled linear:  y = x @ W^T + b    (W stored PyTorch-style (Cout, Cin))
# --------------------------------------------------------------------------
def _linear_kernel(x_ref, w_ref, b_ref, o_ref):
    k = pl.program_id(2)

    @pl.when(k == 0)
    def _():
        # fold bias into the init of the resident f32 output block
        o_ref[...] = jnp.broadcast_to(b_ref[...], o_ref.shape)

    # bf16 MXU operands, f32 accumulation directly into the output block
    o_ref[...] += jax.lax.dot_general(
        x_ref[...].astype(jnp.bfloat16),
        w_ref[...].astype(jnp.bfloat16),
        dimension_numbers=(((1,), (1,)), ((), ())),   # contract Cin (no W^T copy)
        preferred_element_type=jnp.float32)


def _linear(x2d, w, b, *, tm=512, tn=512, tk=512):
    """x2d: (M, Cin), w: (Cout, Cin), b: (Cout,) -> (M, Cout) float32."""
    M, Cin = x2d.shape
    Cout = w.shape[0]
    tm, Mp = _tile(M, tm, 8)
    tn, Np = _tile(Cout, tn, 128)
    tk, Kp = _tile(Cin, tk, 128)

    if Mp != M or Kp != Cin:
        x2d = jnp.pad(x2d, ((0, Mp - M), (0, Kp - Cin)))
    if Np != Cout or Kp != Cin:
        w = jnp.pad(w, ((0, Np - Cout), (0, Kp - Cin)))
    if Np != Cout:
        b = jnp.pad(b, (0, Np - Cout))
    b2 = b.reshape(1, Np).astype(jnp.float32)

    grid = (Mp // tm, Np // tn, Kp // tk)
    flops = 2 * Mp * Np * Kp
    bytes_acc = x2d.size * x2d.dtype.itemsize + w.size * w.dtype.itemsize \
        + 4 * Mp * Np

    out = pl.pallas_call(
        _linear_kernel,
        out_shape=jax.ShapeDtypeStruct((Mp, Np), jnp.float32),
        grid=grid,
        in_specs=[
            pl.BlockSpec((tm, tk), lambda i, j, k: (i, k)),
            pl.BlockSpec((tn, tk), lambda i, j, k: (j, k)),
            pl.BlockSpec((1, tn), lambda i, j, k: (0, j)),
        ],
        out_specs=pl.BlockSpec((tm, tn), lambda i, j, k: (i, j)),
        compiler_params=pltpu.CompilerParams(
            dimension_semantics=("parallel", "parallel", "arbitrary"),
            vmem_limit_bytes=_vmem_limit()),
        cost_estimate=pl.CostEstimate(flops=int(flops), transcendentals=0,
                                      bytes_accessed=int(bytes_acc)),
    )(x2d, w, b2)

    if Mp != M or Np != Cout:
        out = out[:M, :Cout]
    return out


# --------------------------------------------------------------------------
# Attention core: grid = (heads, batch), one head per step
#   qkv_t : (3, B, H, N, Dh) bf16     bias : (Bb, H, N, N) bf16 or None
#   out   : (B, H, N, Dh) bf16
# --------------------------------------------------------------------------
def _attn_body(qkv_ref, bias_ref, o_ref, scale):
    q = qkv_ref[0, 0, 0]                       # (N, Dh) bf16
    k = qkv_ref[1, 0, 0]                       # (N, Dh) bf16
    v = qkv_ref[2, 0, 0]                       # (N, Dh) bf16

    # QK^T: contract head_dim, bf16 operands, f32 result; scale in f32
    s = jax.lax.dot_general(
        q, k, dimension_numbers=(((1,), (1,)), ((), ())),
        preferred_element_type=jnp.float32) * scale                 # (N, N)
    if bias_ref is not None:
        s = s + bias_ref[0, 0].astype(jnp.float32)

    # numerically-stable softmax along last dim (EUP approx reciprocal)
    s = s - jnp.max(s, axis=-1, keepdims=True)
    p = jnp.exp(s)
    p = p * pl.reciprocal(jnp.sum(p, axis=-1, keepdims=True), approx=True)

    o_ref[0, 0] = jnp.dot(p.astype(jnp.bfloat16), v,
                          preferred_element_type=jnp.float32).astype(o_ref.dtype)


def _attn_kernel_bias(qkv_ref, bias_ref, o_ref, *, scale):
    _attn_body(qkv_ref, bias_ref, o_ref, scale)


def _attn_kernel_nobias(qkv_ref, o_ref, *, scale):
    _attn_body(qkv_ref, None, o_ref, scale)


def _attention_core(qkv_t, bias, scale):
    _, B, H, N, Dh = qkv_t.shape
    grid = (H, B)   # h outermost: a batch-shared bias block stays VMEM-resident

    qkv_spec = pl.BlockSpec((3, 1, 1, N, Dh), lambda h, b: (0, b, h, 0, 0))
    out_spec = pl.BlockSpec((1, 1, N, Dh), lambda h, b: (b, h, 0, 0))
    out_shape = jax.ShapeDtypeStruct((B, H, N, Dh), jnp.bfloat16)

    flops = 4 * B * H * N * N * Dh                  # QK^T + PV
    trans = B * H * N * N                           # exp
    bytes_acc = qkv_t.size * 2 + B * H * N * Dh * 2
    if bias is not None:
        bytes_acc += bias.size * 2

    params = pltpu.CompilerParams(
        dimension_semantics=("parallel", "parallel"),
        vmem_limit_bytes=_vmem_limit())
    cost = pl.CostEstimate(flops=int(flops), transcendentals=int(trans),
                           bytes_accessed=int(bytes_acc))

    if bias is None:
        kern = functools.partial(_attn_kernel_nobias, scale=scale)
        return pl.pallas_call(
            kern, out_shape=out_shape, grid=grid,
            in_specs=[qkv_spec], out_specs=out_spec,
            compiler_params=params, cost_estimate=cost,
        )(qkv_t)

    Bb = bias.shape[0]
    if Bb == 1:
        bias_spec = pl.BlockSpec((1, 1, N, N), lambda h, b: (0, h, 0, 0))
    else:
        bias_spec = pl.BlockSpec((1, 1, N, N), lambda h, b: (b, h, 0, 0))
    kern = functools.partial(_attn_kernel_bias, scale=scale)
    return pl.pallas_call(
        kern, out_shape=out_shape, grid=grid,
        in_specs=[qkv_spec, bias_spec], out_specs=out_spec,
        compiler_params=params, cost_estimate=cost,
    )(qkv_t, bias)


# --------------------------------------------------------------------------
# Module
# --------------------------------------------------------------------------
class AttentionPallas:
    def __init__(self, dim, num_heads=8, qkv_bias=False, qk_scale=None,
                 window_size=None, attn_head_dim=None, key=None):
        self.num_heads = num_heads
        head_dim = dim // num_heads
        if attn_head_dim is not None:
            head_dim = attn_head_dim
        self.head_dim = head_dim
        all_head_dim = head_dim * num_heads
        self.all_head_dim = all_head_dim
        self.scale = qk_scale or head_dim ** (-0.5)
        self.dim = dim
        self.window_size = window_size

        if key is None:
            key = jax.random.PRNGKey(0)
        k1, k2, k3, k4, k5 = jax.random.split(key, 5)

        # deterministic synthetic parameters (PyTorch Linear stores (out, in))
        self.w_qkv = jax.random.normal(k1, (all_head_dim * 3, dim), jnp.float32) * 0.05
        if qkv_bias:
            self.b_qkv = jax.random.normal(k2, (all_head_dim * 3,), jnp.float32) * 0.05
        else:
            self.b_qkv = jnp.zeros((all_head_dim * 3,), jnp.float32)
        self.w_proj = jax.random.normal(k3, (dim, all_head_dim), jnp.float32) * 0.05
        self.b_proj = jax.random.normal(k4, (dim,), jnp.float32) * 0.05

        self.rel_bias = None            # cached (1, H, N, N) f32
        self.rel_bias_bf16 = None       # cached bf16 copy for the kernel
        if window_size is not None:
            Wh, Ww = window_size
            N = Wh * Ww
            self.num_relative_distance = (2 * Wh - 1) * (2 * Ww - 1)
            # PyTorch inits the table to zeros; use small random values so the
            # bias path is actually exercised (deterministic, synthetic).
            self.relative_position_bias_table = (
                jax.random.normal(k5, (self.num_relative_distance, num_heads),
                                  jnp.float32) * 0.05)
            coords_h = jnp.arange(Wh)
            coords_w = jnp.arange(Ww)
            coords = jnp.stack(jnp.meshgrid(coords_h, coords_w, indexing="ij"))
            coords_flat = coords.reshape(2, -1)                         # (2, N)
            rel = coords_flat[:, :, None] - coords_flat[:, None, :]     # (2, N, N)
            rel = rel.transpose(1, 2, 0)                                # (N, N, 2)
            rel = rel.at[:, :, 0].add(Wh - 1)
            rel = rel.at[:, :, 1].add(Ww - 1)
            rel = rel.at[:, :, 0].multiply(2 * Ww - 1)
            self.relative_position_index = rel.sum(-1)                  # (N, N)
            # Precompute the (1, H, N, N) bias once (gather + transpose hoisted
            # out of every forward pass), plus its bf16 copy for the kernel.
            tbl = self.relative_position_bias_table
            idx = self.relative_position_index.reshape(-1)
            rb = tbl[idx].reshape(N, N, num_heads).transpose(2, 0, 1)[None]
            self.rel_bias = rb
            self.rel_bias_bf16 = rb.astype(jnp.bfloat16)
        else:
            self.relative_position_bias_table = None
            self.relative_position_index = None

    def __call__(self, x, rel_pos_bias=None):
        B, N, C = x.shape
        H, Dh, ahd = self.num_heads, self.head_dim, self.all_head_dim

        # qkv projection (tiled Pallas matmul, bf16 MXU / f32 accumulate)
        qkv = _linear(x.reshape(B * N, C), self.w_qkv, self.b_qkv)      # (M, 3*ahd)

        # head split to (3, B, H, N, Dh) bf16 (XLA transpose+cast; keeps every
        # kernel BlockSpec's last two dims equal to full array dims)
        qkv_t = qkv.reshape(B, N, 3, H, Dh).transpose(2, 0, 3, 1, 4)
        qkv_t = qkv_t.astype(jnp.bfloat16)

        # additive logits bias: cached window bias and/or external bias
        if rel_pos_bias is None:
            bias = self.rel_bias_bf16                         # (1,H,N,N) or None
        else:
            rpb = jnp.asarray(rel_pos_bias, jnp.float32)
            if rpb.ndim == 3:
                rpb = rpb[None]                               # (1, H, N, N)
            bias = rpb if self.rel_bias is None else self.rel_bias + rpb
            bias = bias.astype(jnp.bfloat16)                  # (1|B, H, N, N)

        # attention core (Pallas, one head per grid step)
        o = _attention_core(qkv_t, bias, self.scale)          # (B, H, N, Dh) bf16

        # head merge (XLA transpose) + output projection (Pallas matmul)
        o = o.transpose(0, 2, 1, 3).reshape(B * N, ahd)
        out = _linear(o, self.w_proj, self.b_proj)
        # attn_drop / proj_drop are identity in eval mode (p=0.0) -> omitted
        return out.reshape(B, N, self.dim)


# --------------------------------------------------------------------------
# Pure-JAX reference (f32, for correctness check)
# --------------------------------------------------------------------------
def _reference(mod: AttentionPallas, x, rel_pos_bias=None):
    B, N, C = x.shape
    H, Dh = mod.num_heads, mod.head_dim
    qkv = x @ mod.w_qkv.T + mod.b_qkv
    qkv = qkv.reshape(B, N, 3, H, Dh).transpose(2, 0, 3, 1, 4)
    q, k, v = qkv[0] * mod.scale, qkv[1], qkv[2]
    attn = jnp.einsum("bhnd,bhmd->bhnm", q, k)
    if mod.rel_bias is not None:
        attn = attn + mod.rel_bias
    if rel_pos_bias is not None:
        attn = attn + rel_pos_bias
    attn = jax.nn.softmax(attn, axis=-1)
    o = jnp.einsum("bhnm,bhmd->bhnd", attn, v)
    o = o.transpose(0, 2, 1, 3).reshape(B, N, mod.all_head_dim)
    return o @ mod.w_proj.T + mod.b_proj


# --------------------------------------------------------------------------
if __name__ == "__main__":
    key = jax.random.PRNGKey(0)
    kx, kp1, kp2, kb = jax.random.split(key, 4)

    B, dim, num_heads = 2, 32, 4
    window = (4, 4)                 # => N = 16 tokens
    N = window[0] * window[1]

    x = jax.random.normal(kx, (B, N, dim), jnp.float32)

    # windowed variant (relative-position-bias path)
    mod = AttentionPallas(dim, num_heads=num_heads, qkv_bias=True,
                          window_size=window, key=kp1)
    out = jax.block_until_ready(mod(x))
    ref = _reference(mod, x)
    assert out.shape == (B, N, dim)
    err = float(jnp.max(jnp.abs(out - ref)))
    assert err < 1e-2, err          # bf16 MXU operands -> looser tolerance

    # non-windowed variant (no-bias kernel path)
    mod2 = AttentionPallas(dim, num_heads=num_heads, qkv_bias=False,
                           window_size=None, key=kp2)
    out2 = jax.block_until_ready(mod2(x))
    ref2 = _reference(mod2, x)
    err2 = float(jnp.max(jnp.abs(out2 - ref2)))
    assert err2 < 1e-2, err2

    # external per-batch rel_pos_bias path
    rpb = jax.random.normal(kb, (B, num_heads, N, N), jnp.float32) * 0.1
    out3 = jax.block_until_ready(mod2(x, rel_pos_bias=rpb))
    ref3 = _reference(mod2, x, rel_pos_bias=rpb)
    err3 = float(jnp.max(jnp.abs(out3 - ref3)))
    assert err3 < 1e-2, err3

    print("KERNEL_OK")
</pallas_src>

<mosaic_0001>
module attributes {stable_mosaic.version = 11 : i64} {
  func.func @_linear_kernel(%arg0: i32, %arg1: i32, %arg2: i32, %arg3: memref<32x32xf32, #tpu.memory_space<vmem>>, %arg4: memref<96x32xf32, #tpu.memory_space<vmem>>, %arg5: memref<1x96xf32, #tpu.memory_space<vmem>>, %arg6: memref<32x96xf32, #tpu.memory_space<vmem>>) attributes {dimension_semantics = [#tpu.dimension_semantics<parallel>, #tpu.dimension_semantics<parallel>, #tpu.dimension_semantics<arbitrary>], iteration_bounds = array<i64: 1, 1, 1>, scalar_prefetch = 0 : i64, scratch_operands = 0 : i64, tpu.core_type = #tpu.core_type<tc>, window_params = [{transform_indices = @transform_0, window_bounds = array<i64: 32, 32>}, {transform_indices = @transform_1, window_bounds = array<i64: 96, 32>}, {transform_indices = @transform_2, window_bounds = array<i64: 1, 96>}, {transform_indices = @transform_3, window_bounds = array<i64: 32, 96>}]} {
    %c0_i32 = arith.constant 0 : i32
    %0 = arith.cmpi eq, %arg2, %c0_i32 : i32
    %1 = arith.extui %0 : i1 to i32
    %c0_i32_0 = arith.constant 0 : i32
    %2 = arith.cmpi ne, %1, %c0_i32_0 : i32
    scf.if %2 {
      %c0_8 = arith.constant 0 : index
      %c0_9 = arith.constant 0 : index
      %11 = vector.load %arg5[%c0_8, %c0_9] : memref<1x96xf32, #tpu.memory_space<vmem>>, vector<1x96xf32>
      %12 = vector.shape_cast %11 : vector<1x96xf32> to vector<1x96xf32>
      %13 = vector.broadcast %12 : vector<1x96xf32> to vector<32x96xf32>
      %c0_10 = arith.constant 0 : index
      %c0_11 = arith.constant 0 : index
      %14 = vector.load %arg6[%c0_10, %c0_11] : memref<32x96xf32, #tpu.memory_space<vmem>>, vector<32x96xf32>
      tpu.vector_store %arg6[%c0_10, %c0_11], %13 {strides = array<i32>} : memref<32x96xf32, #tpu.memory_space<vmem>>, vector<32x96xf32>,
    } else {
    }
    %c0 = arith.constant 0 : index
    %c0_1 = arith.constant 0 : index
    %3 = vector.load %arg6[%c0, %c0_1] : memref<32x96xf32, #tpu.memory_space<vmem>>, vector<32x96xf32>
    %c0_2 = arith.constant 0 : index
    %c0_3 = arith.constant 0 : index
    %4 = vector.load %arg3[%c0_2, %c0_3] : memref<32x32xf32, #tpu.memory_space<vmem>>, vector<32x32xf32>
    %5 = arith.truncf %4 : vector<32x32xf32> to vector<32x32xbf16>
    %c0_4 = arith.constant 0 : index
    %c0_5 = arith.constant 0 : index
    %6 = vector.load %arg4[%c0_4, %c0_5] : memref<96x32xf32, #tpu.memory_space<vmem>>, vector<96x32xf32>
    %7 = arith.truncf %6 : vector<96x32xf32> to vector<96x32xbf16>
    %cst = arith.constant dense<0.000000e+00> : vector<32x96xf32>
    %8 = tpu.matmul %5, %7, %cst {dimension_numbers = #tpu.dot_dimension_numbers<[1], [1], [0], [0], [0, 0, 1, 0], [], []>} : vector<32x32xbf16>, vector<96x32xbf16>, vector<32x96xf32> -> vector<32x96xf32>
    %9 = arith.addf %3, %8 : vector<32x96xf32>
    %c0_6 = arith.constant 0 : index
    %c0_7 = arith.constant 0 : index
    %10 = vector.load %arg6[%c0_6, %c0_7] : memref<32x96xf32, #tpu.memory_space<vmem>>, vector<32x96xf32>
    tpu.vector_store %arg6[%c0_6, %c0_7], %9 {strides = array<i32>} : memref<32x96xf32, #tpu.memory_space<vmem>>, vector<32x96xf32>,
    return
  }
  func.func @transform_0(%arg0: i32, %arg1: i32, %arg2: i32) -> (i32, i32) {
    %c0_i32 = arith.constant 0 : i32
    return %arg0, %arg2 : i32, i32
  }
  func.func @transform_1(%arg0: i32, %arg1: i32, %arg2: i32) -> (i32, i32) {
    %c0_i32 = arith.constant 0 : i32
    return %arg1, %arg2 : i32, i32
  }
  func.func @transform_2(%arg0: i32, %arg1: i32, %arg2: i32) -> (i32, i32) {
    %c0_i32 = arith.constant 0 : i32
    %c0_i32_0 = arith.constant 0 : i32
    return %c0_i32, %arg1 : i32, i32
  }
  func.func @transform_3(%arg0: i32, %arg1: i32, %arg2: i32) -> (i32, i32) {
    %c0_i32 = arith.constant 0 : i32
    return %arg0, %arg1 : i32, i32
  }
}

</mosaic_0001>

<llo_original>
// kernel: tpu_custom_call.1
$region0: #{tpu_custom_call.1}
  #allocation0 [shape = 'u32[]', space=smem, size = 0x4, offset = 0x4, fixed_abs, tag = 'smem constant byte address 0x4 - core index']
  #allocation1 [shape = 'u32[144,128]{1,0:T(1,128)}', space=vmem, size = 0x12000, scoped, tag = 'internal scratch']
  %s0 = inlined_call_operand.vmem [shape: f32[32,32], index: 0, kind: input, shape index: {}]
  %s1 = inlined_call_operand.vmem [shape: f32[96,32], index: 1, kind: input, shape index: {}]
  %s2 = inlined_call_operand.vmem [shape: f32[1,96], index: 2, kind: input, shape index: {}]
  %s3 = inlined_call_operand.hbm [shape: f32[32,96], index: 3, kind: output, shape index: {}]
  %s4 = sld [smem:[#allocation0]]
  $region26: #{tpu_custom_call.1} parent=0
    _
  %s6 = ssub.s32 1, %s4
  %s7 = scalar_select 0, %s6, %s4
  $region1: #{tpu_custom_call.1} parent=0
    #allocation2 [shape = 'u8[16384]{0}', space=vmem, size = 0x4000, scoped, tag = 'output window, operand 0, single buffered']
    #allocation3 [shape = 's32[1]{0}', space=sflag, size = 0x4, scoped, tag = 'scoped memory for tpu_custom_call.1']
    %8 = vsyncpa [#allocation3], 0
    // Predicated region
    $region2: #{tpu_custom_call.1} parent=1 // pred_check
      _
    $region3: #{tpu_custom_call.1} parent=1 // pred_check_branch
      %10 = sbr.rel (0) target = $region5
    $region4: #{tpu_custom_call.1} parent=1 // pred_region
      _
    $region5: #{tpu_custom_call.1} parent=1 // pred_fallthru
      _
    // Predicated region
    $region6: #{tpu_custom_call.1} parent=1 // pred_check
      _
    $region7: #{tpu_custom_call.1} parent=1 // pred_check_branch
      %12 = sbr.rel (0) target = $region9
    $region8: #{tpu_custom_call.1} parent=1 // pred_region
      _
    $region9: #{tpu_custom_call.1} parent=1 // pred_fallthru
      _
    // Predicated region
    $region10: #{tpu_custom_call.1} parent=1 // pred_check
      _
    $region11: #{tpu_custom_call.1} parent=1 // pred_check_branch
      %14 = sbr.rel (0) target = $region13
    $region12: #{tpu_custom_call.1} parent=1 // pred_region
      _
    $region13: #{tpu_custom_call.1} parent=1 // pred_fallthru
      _
    %p16 = scmp.eq.s32.totalorder 0, 0
    // Predicated region
    $region14: #{tpu_custom_call.1} parent=1 // pred_check
      %p17 = pneg %p16
    $region15: #{tpu_custom_call.1} parent=1 // pred_check_branch
      %19 = sbr.rel (%p17) target = $region17
    $region16: #{tpu_custom_call.1} parent=1 // pred_region
      %v20 = vld [vmem:[%s2] sm:$0x1]
      %v22 = vlaneseq
      %v23 = vshrl.u32 %v22, 7
      %v24 = vsub.s32 0, %v23
      %v25 = vrot.slane %v20, %v24
      %vm27 = vcmask 785408
      %28 = vst.msk [vmem:[#allocation2] sm:$0xff] %vm27, %v25
      %29 = vst.msk [vmem:[#allocation2 + $0x8] sm:$0xff] %vm27, %v25
      %30 = vst.msk [vmem:[#allocation2 + $0x10] sm:$0xff] %vm27, %v25
      %31 = vst.msk [vmem:[#allocation2 + $0x18] sm:$0xff] %vm27, %v25
    $region17: #{tpu_custom_call.1} parent=1 // pred_fallthru
      _
    %v32 = vld [vmem:[#allocation2] sm:$0xff]
    %v33 = vld [vmem:[#allocation2 + $0x8] sm:$0xff]
    %v34 = vld [vmem:[#allocation2 + $0x10] sm:$0xff]
    %v35 = vld [vmem:[#allocation2 + $0x18] sm:$0xff]
    %v36 = vld [vmem:[%s0] sm:$0xff]
    %v37 = vld [vmem:[%s0 + $0x8] sm:$0xff]
    %v38 = vld [vmem:[%s0 + $0x10] sm:$0xff]
    %v39 = vld [vmem:[%s0 + $0x18] sm:$0xff]
    %v40 = vpack.c.bf16 %v37, %v36
    %v41 = vpack.c.bf16 %v39, %v38
    %v42 = vld [vmem:[%s1] sm:$0xff]
    %v43 = vld [vmem:[%s1 + $0x8] sm:$0xff]
    %v44 = vld [vmem:[%s1 + $0x10] sm:$0xff]
    %v45 = vld [vmem:[%s1 + $0x18] sm:$0xff]
    %v46 = vld [vmem:[%s1 + $0x20] sm:$0xff]
    %v47 = vld [vmem:[%s1 + $0x28] sm:$0xff]
    %v48 = vld [vmem:[%s1 + $0x30] sm:$0xff]
    %v49 = vld [vmem:[%s1 + $0x38] sm:$0xff]
    %v50 = vld [vmem:[%s1 + $0x40] sm:$0xff]
    %v51 = vld [vmem:[%s1 + $0x48] sm:$0xff]
    %v52 = vld [vmem:[%s1 + $0x50] sm:$0xff]
    %v53 = vld [vmem:[%s1 + $0x58] sm:$0xff]
    %v54 = vpack.c.bf16 %v43, %v42
    %v55 = vpack.c.bf16 %v45, %v44
    %v56 = vpack.c.bf16 %v47, %v46
    %v57 = vpack.c.bf16 %v49, %v48
    %v58 = vpack.c.bf16 %v51, %v50
    %v59 = vpack.c.bf16 %v53, %v52
    %vm60 = vcmask 261120
    %v62 = vsel %vm60, %v40, 0
    %v65 = vsel %vm60, %v41, 0
    %v68 = vsel %vm60, %v54, 0
    %v71 = vsel %vm60, %v55, 0
    %v74 = vsel %vm60, %v56, 0
    %v77 = vsel %vm60, %v57, 0
    %v80 = vsel %vm60, %v58, 0
    %v83 = vsel %vm60, %v59, 0
    %85 = vmatprep.subr.bf16.mxu0 0
    %86 = vmatpush1.bf16.xpose.msra.mxu0 0
    %87 = vmatprep.subr.bf16.mxu0 0
    %88 = vmatpush1.bf16.xpose.msra.mxu0 0
    %89 = vmatprep.subr.bf16.mxu0 0
    %90 = vmatpush1.bf16.xpose.msra.mxu0 %v83
    %91 = vmatprep.subr.bf16.mxu0 0
    %92 = vmatpush1.bf16.xpose.msra.mxu0 %v80
    %93 = vmatprep.subr.bf16.mxu0 0
    %94 = vmatpush1.bf16.xpose.msra.mxu0 %v77
    %95 = vmatprep.subr.bf16.mxu0 0
    %96 = vmatpush1.bf16.xpose.msra.mxu0 %v74
    %97 = vmatprep.subr.bf16.mxu0 0
    %98 = vmatpush1.bf16.xpose.msra.mxu0 %v71
    %99 = vmatprep.subr.bf16.mxu0 0
    %100 = vmatpush1.bf16.xpose.msra.mxu0 %v68
    %101 = vmatprep.subr.bf16.mxu0 0
    %102 = vmatpush2.bf16.xpose.msra.mxu0 0
    %103 = vmatprep.subr.bf16.mxu0 0
    %104 = vmatpush2.bf16.xpose.msra.mxu0 0
    %105 = vmatprep.subr.bf16.mxu0 0
    %106 = vmatpush2.bf16.xpose.msra.mxu0 0
    %107 = vmatprep.subr.bf16.mxu0 0
    %108 = vmatpush2.bf16.xpose.msra.mxu0 0
    %109 = vmatprep.subr.bf16.mxu0 0
    %110 = vmatpush2.bf16.xpose.msra.mxu0 0
    %111 = vmatprep.subr.bf16.mxu0 0
    %112 = vmatpush2.bf16.xpose.msra.mxu0 0
    %113 = vmatprep.subr.bf16.mxu0 0
    %114 = vmatpush2.bf16.xpose.msra.mxu0 0
    %115 = vmatprep.subr.bf16.mxu0 0
    %116 = vmatpush2.bf16.xpose.msra.mxu0 0
    %117 = vmatprep.mubr.bf16.mxu0 0
    %118 = vmatmul.mubr.bf16.gmra.mxu0 %v62
    %v119 = vpop.f32.mrf.mxu0
    %v120 = vadd.f32 0.0, %v119
    %v121 = vpop.f32.mrf.mxu0
    %v122 = vpop.f32.mrf.mxu0
    %v123 = vadd.f32 0.0, %v122
    %v124 = vpop.f32.mrf.mxu0
    %125 = vmatprep.mubr.bf16.mxu0 0
    %126 = vmatmul.mubr.bf16.gmra.mxu0 %v65
    %v127 = vpop.f32.mrf.mxu0
    %v128 = vadd.f32 0.0, %v127
    %v129 = vpop.f32.mrf.mxu0
    %v130 = vpop.f32.mrf.mxu0
    %v131 = vadd.f32 0.0, %v130
    %v132 = vpop.f32.mrf.mxu0
    %133 = vdwg.mxu0
    %v134 = vadd.f32 %v32, %v120
    %v135 = vadd.f32 %v33, %v123
    %v136 = vadd.f32 %v34, %v128
    %v137 = vadd.f32 %v35, %v131
    %vm138 = vcmask 785408
    %139 = vst.msk [vmem:[#allocation2] sm:$0xff] %vm138, %v134
    %140 = vst.msk [vmem:[#allocation2 + $0x8] sm:$0xff] %vm138, %v135
    %141 = vst.msk [vmem:[#allocation2 + $0x10] sm:$0xff] %vm138, %v136
    %142 = vst.msk [vmem:[#allocation2 + $0x18] sm:$0xff] %vm138, %v137
    // Predicated region
    $region18: #{tpu_custom_call.1} parent=1 // pred_check
      _
    $region19: #{tpu_custom_call.1} parent=1 // pred_check_branch
      %144 = sbr.rel (0) target = $region21
    $region20: #{tpu_custom_call.1} parent=1 // pred_region
      %s146 = ssub.s32 512, 512
      %147 = vsyncadd [#allocation3], %s146
      %s148 = sshll.u32 [#allocation2], 4
      %s149 = int_to_ptr.vmem [resolvable:$true] %s148
      %154 = dma.vmem_to_hbm [thread:$0]  %s149, 512, %s3, [#allocation3], 128, 128, 8
    $region21: #{tpu_custom_call.1} parent=1 // pred_fallthru
      _
    // Predicated region
    $region22: #{tpu_custom_call.1} parent=1 // pred_check
      _
    $region23: #{tpu_custom_call.1} parent=1 // pred_check_branch
      %156 = sbr.rel (0) target = $region25
    $region24: #{tpu_custom_call.1} parent=1 // pred_region
      %157 = dma.done [#allocation3], 512
    $region25: #{tpu_custom_call.1} parent=1 // pred_fallthru
      _
    %158 = vsyncpa [#allocation3], 1

</llo_original>
